<compile_context>
chip_gen: v5e
topology: v5e:2x2
jax: 0.10.0
libtpu: 0.0.40
codegen_flags: <defaults>
</compile_context>

<pallas_src>
import jax
import jax.numpy as jnp
import numpy as np
from jax.experimental import pallas as pl
from jax.experimental.pallas import tpu as pltpu

EMBED_DIM = 768
MASK_HIDDEN_DIM = 100

TILE_M_FUSED = 512    # rows/tile, fused embeds->masked-x kernel (v5e-safe; raise on v6e/v7x)
TILE_M_MLP = 512      # rows/tile, raw-p MLP kernel
TILE_M_MASK = 1024    # rows/tile, mask-only streaming kernels (~13 MiB double-buffered)
VMEM_LIMIT_BYTES = 32 * 1024 * 1024


def _round_up(n, m):
    return ((n + m - 1) // m) * m


def _pick_tile(rows, tile_m):
    # Shrink the tile for tiny inputs but keep sublane (8) alignment; the last
    # grid block may be ragged (Pallas drops out-of-bounds writes).
    return min(tile_m, max(8, _round_up(rows, 8)))


def _compiler_params():
    return pltpu.CompilerParams(
        dimension_semantics=("parallel",),
        vmem_limit_bytes=VMEM_LIMIT_BYTES,
    )


def _prep_mlp_weights(w1, b1):
    D, H = w1.shape
    Hp = _round_up(H, 128)
    # Zero-padded hidden columns are inert: pre-act = 0 -> tanh = 0.
    w1p = jnp.zeros((D, Hp), jnp.bfloat16).at[:, :H].set(w1.astype(jnp.bfloat16))
    b1p = jnp.zeros((1, Hp), jnp.float32).at[0, :H].set(b1.astype(jnp.float32))
    return w1p, b1p, Hp


# ----------------------------------------------------------------------------
# Kernel 1 (raw logits): p = hidden2p(tanh(linear_layer(embeds)))
# ----------------------------------------------------------------------------
def _p_kernel(e_ref, w1_ref, b1_ref, w2_ref, b2_ref, p_ref):
    h = jnp.tanh(
        jnp.dot(e_ref[...].astype(jnp.bfloat16), w1_ref[...],
                preferred_element_type=jnp.float32)
        + b1_ref[...]
    )
    p_ref[...] = (
        jnp.dot(h, w2_ref[...], preferred_element_type=jnp.float32) + b2_ref[...]
    ).astype(p_ref.dtype)


def forward_sent_batch(embeds, w1, b1, w2, b2):
    """embeds: (B, S, 768) -> p: (B, S, 2) raw logits (f32)."""
    B, S, D = embeds.shape
    H = w1.shape[1]
    rows = B * S
    tile_m = _pick_tile(rows, TILE_M_MLP)

    e2 = embeds.reshape(rows, D)
    w1p, b1p, Hp = _prep_mlp_weights(w1, b1)
    w2p = jnp.zeros((Hp, 2), jnp.float32).at[:H, :].set(w2.astype(jnp.float32))
    b2p = b2.reshape(1, 2).astype(jnp.float32)

    p2 = pl.pallas_call(
        _p_kernel,
        grid=(pl.cdiv(rows, tile_m),),
        out_shape=jax.ShapeDtypeStruct((rows, 2), jnp.float32),
        in_specs=[
            pl.BlockSpec((tile_m, D), lambda i: (i, 0)),
            pl.BlockSpec((D, Hp), lambda i: (0, 0)),   # VMEM-resident weights
            pl.BlockSpec((1, Hp), lambda i: (0, 0)),
            pl.BlockSpec((Hp, 2), lambda i: (0, 0)),
            pl.BlockSpec((1, 2), lambda i: (0, 0)),
        ],
        out_specs=pl.BlockSpec((tile_m, 2), lambda i: (i, 0)),
        compiler_params=_compiler_params(),
    )(e2, w1p, b1p, w2p, b2p)
    return p2.reshape(B, S, 2)


def get_statistics_batch(embeds, w1, b1, w2, b2):
    return forward_sent_batch(embeds, w1, b1, w2, b2)


# ----------------------------------------------------------------------------
# Mask-only kernels (consume a 1-lane logit column z and the x stream)
#   eval : z = p1 - p0              -> sigmoid(z) == softmax(p)[..., 1]
#   train: z = (p1 - p0) + logistic -> hard indicator (z > 0)
# ----------------------------------------------------------------------------
def _mask_eval_kernel(z_ref, x_ref, o_ref):
    prob1 = 1.0 / (1.0 + jnp.exp(-z_ref[...]))
    o_ref[...] = (prob1 * x_ref[...]).astype(o_ref.dtype)


def _mask_train_kernel(z_ref, x_ref, o_ref):
    # Tie z == 0 -> mask 0; differs from torch argmax tie-break on a
    # measure-zero set only.
    r = (z_ref[...] > 0.0).astype(jnp.float32)
    o_ref[...] = (r * x_ref[...]).astype(o_ref.dtype)


def vmask_forward(x, p, flag, key=None, donate_x=False):
    """Module-faithful forward: x (B,S,768), p (B,S,2) -> x' (B,S,768)."""
    B, S, D = x.shape
    rows = B * S
    tile_m = _pick_tile(rows, TILE_M_MASK)

    x2 = x.reshape(rows, D)
    d = (p[..., 1] - p[..., 0]).reshape(rows, 1).astype(jnp.float32)

    if flag == "train":
        if key is None:
            raise ValueError("train-mode VMASK requires an explicit PRNG key")
        # One logistic sample per row == g1 - g0 (difference of two Gumbels).
        z = d + jax.random.logistic(key, (rows, 1), dtype=jnp.float32)
        kernel = _mask_train_kernel
    else:
        z = d
        kernel = _mask_eval_kernel

    out2 = pl.pallas_call(
        kernel,
        grid=(pl.cdiv(rows, tile_m),),
        out_shape=jax.ShapeDtypeStruct((rows, D), x.dtype),
        in_specs=[
            pl.BlockSpec((tile_m, 1), lambda i: (i, 0)),
            pl.BlockSpec((tile_m, D), lambda i: (i, 0)),
        ],
        out_specs=pl.BlockSpec((tile_m, D), lambda i: (i, 0)),
        input_output_aliases={1: 0} if donate_x else {},
        compiler_params=_compiler_params(),
    )(z, x2)
    return out2.reshape(B, S, D)


# ----------------------------------------------------------------------------
# Fused kernels: embeds tile -> logit diff -> mask -> x' in one HBM pass
# ----------------------------------------------------------------------------
def _mlp_logit_diff(e_ref, w1_ref, b1_ref, w2d_ref, b2d_ref):
    h = jnp.tanh(
        jnp.dot(e_ref[...].astype(jnp.bfloat16), w1_ref[...],
                preferred_element_type=jnp.float32)
        + b1_ref[...]
    )
    # Second linear folded to a single difference column: VPU mul + XLU reduce,
    # no 2-lane output / lane slicing.
    return jnp.sum(h * w2d_ref[...], axis=1, keepdims=True) + b2d_ref[...]


def _fused_eval_kernel(e_ref, x_ref, w1_ref, b1_ref, w2d_ref, b2d_ref, o_ref):
    d = _mlp_logit_diff(e_ref, w1_ref, b1_ref, w2d_ref, b2d_ref)
    prob1 = 1.0 / (1.0 + jnp.exp(-d))          # == softmax(p, -1)[..., 1]
    o_ref[...] = (prob1 * x_ref[...]).astype(o_ref.dtype)


def _fused_train_kernel(e_ref, x_ref, n_ref, w1_ref, b1_ref, w2d_ref, b2d_ref, o_ref):
    d = _mlp_logit_diff(e_ref, w1_ref, b1_ref, w2d_ref, b2d_ref)
    # Hard Gumbel-softmax class-1 indicator: argmax == 1 <=> d + (g1 - g0) > 0.
    r = (d + n_ref[...] > 0.0).astype(jnp.float32)
    o_ref[...] = (r * x_ref[...]).astype(o_ref.dtype)


def vmask_fused_forward(embeds, x, w1, b1, w2, b2, flag, key=None, donate_x=False):
    """Single-pass VMASK: embeds (B,S,768), x (B,S,768) -> x' (B,S,768)."""
    B, S, D = x.shape
    H = w1.shape[1]
    rows = B * S
    tile_m = _pick_tile(rows, TILE_M_FUSED)
    grid = (pl.cdiv(rows, tile_m),)

    e2 = embeds.reshape(rows, D)
    x2 = x.reshape(rows, D)
    w1p, b1p, Hp = _prep_mlp_weights(w1, b1)
    w2d = jnp.zeros((1, Hp), jnp.float32).at[0, :H].set(
        (w2[:, 1] - w2[:, 0]).astype(jnp.float32))
    b2d = (b2[1] - b2[0]).reshape(1, 1).astype(jnp.float32)

    e_spec = pl.BlockSpec((tile_m, D), lambda i: (i, 0))
    x_spec = pl.BlockSpec((tile_m, D), lambda i: (i, 0))
    w_specs = [
        pl.BlockSpec((D, Hp), lambda i: (0, 0)),   # VMEM-resident weights
        pl.BlockSpec((1, Hp), lambda i: (0, 0)),
        pl.BlockSpec((1, Hp), lambda i: (0, 0)),
        pl.BlockSpec((1, 1), lambda i: (0, 0)),
    ]
    out_spec = pl.BlockSpec((tile_m, D), lambda i: (i, 0))
    aliases = {1: 0} if donate_x else {}          # x is input index 1 in both branches

    if flag == "train":
        if key is None:
            raise ValueError("train-mode VMASK requires an explicit PRNG key")
        noise = jax.random.logistic(key, (rows, 1), dtype=jnp.float32)
        out2 = pl.pallas_call(
            _fused_train_kernel,
            grid=grid,
            out_shape=jax.ShapeDtypeStruct((rows, D), x.dtype),
            in_specs=[e_spec, x_spec, pl.BlockSpec((tile_m, 1), lambda i: (i, 0))]
            + w_specs,
            out_specs=out_spec,
            input_output_aliases=aliases,
            compiler_params=_compiler_params(),
        )(e2, x2, noise, w1p, b1p, w2d, b2d)
    else:
        out2 = pl.pallas_call(
            _fused_eval_kernel,
            grid=grid,
            out_shape=jax.ShapeDtypeStruct((rows, D), x.dtype),
            in_specs=[e_spec, x_spec] + w_specs,
            out_specs=out_spec,
            input_output_aliases=aliases,
            compiler_params=_compiler_params(),
        )(e2, x2, w1p, b1p, w2d, b2d)
    return out2.reshape(B, S, D)


# ----------------------------------------------------------------------------
# Demo / checks
# ----------------------------------------------------------------------------
def _assert_hard_mask(out, x):
    B, S, D = x.shape
    o = np.asarray(out).reshape(B * S, D)
    xr = np.asarray(x).reshape(B * S, D)
    for i in range(B * S):
        assert np.allclose(o[i], 0.0, atol=1e-6) or np.allclose(
            o[i], xr[i], rtol=1e-5, atol=1e-6
        ), f"row {i} is neither masked nor passed through"


if __name__ == "__main__":
    key = jax.random.PRNGKey(0)
    k_e, k_x, k_w1, k_b1, k_w2, k_b2 = jax.random.split(key, 6)

    B, S, D, H = 2, 8, EMBED_DIM, MASK_HIDDEN_DIM

    # PyTorch nn.Linear-style uniform init (deterministic via PRNGKey(0)).
    bound1 = 1.0 / np.sqrt(D)
    bound2 = 1.0 / np.sqrt(H)
    w1 = jax.random.uniform(k_w1, (D, H), jnp.float32, -bound1, bound1)
    b1 = jax.random.uniform(k_b1, (H,), jnp.float32, -bound1, bound1)
    w2 = jax.random.uniform(k_w2, (H, 2), jnp.float32, -bound2, bound2)
    b2 = jax.random.uniform(k_b2, (2,), jnp.float32, -bound2, bound2)

    embeds = jax.random.normal(k_e, (B, S, D), jnp.float32)
    x = jax.random.normal(k_x, (B, S, D), jnp.float32)

    # Host float64 reference for the MLP and the eval mask.
    e64 = np.asarray(embeds, np.float64)
    p_ref = (
        np.tanh(e64 @ np.asarray(w1, np.float64) + np.asarray(b1, np.float64))
        @ np.asarray(w2, np.float64)
        + np.asarray(b2, np.float64)
    )
    prob1_ref = (1.0 / (1.0 + np.exp(p_ref[..., 0] - p_ref[..., 1])))[..., None]
    eval_ref = prob1_ref * np.asarray(x, np.float64)

    # --- module-faithful two-step path (get_statistics_batch + forward) ---
    p = jax.block_until_ready(forward_sent_batch(embeds, w1, b1, w2, b2))
    np.testing.assert_allclose(np.asarray(p), p_ref, rtol=2e-2, atol=2e-2)

    out_eval = jax.block_until_ready(vmask_forward(x, p, flag="eval"))
    ref_eval_from_p = jax.nn.softmax(p, axis=2)[:, :, 1:2] * x
    np.testing.assert_allclose(
        np.asarray(out_eval), np.asarray(ref_eval_from_p), rtol=1e-5, atol=1e-5
    )

    out_train = jax.block_until_ready(
        vmask_forward(x, p, flag="train", key=jax.random.PRNGKey(42))
    )
    assert out_train.shape == x.shape
    _assert_hard_mask(out_train, x)

    # --- fused single-pass path (embeds -> masked x, no p round-trip) ---
    out_eval_f = jax.block_until_ready(
        vmask_fused_forward(embeds, x, w1, b1, w2, b2, flag="eval")
    )
    np.testing.assert_allclose(np.asarray(out_eval_f), eval_ref, rtol=1e-2, atol=1e-2)
    np.testing.assert_allclose(
        np.asarray(out_eval_f), np.asarray(out_eval), rtol=1e-2, atol=1e-2
    )

    out_train_f = jax.block_until_ready(
        vmask_fused_forward(embeds, x, w1, b1, w2, b2, flag="train",
                            key=jax.random.PRNGKey(42))
    )
    assert out_train_f.shape == x.shape
    _assert_hard_mask(out_train_f, x)

    print("KERNEL_OK")
</pallas_src>

<mosaic_0001>
module attributes {stable_mosaic.version = 11 : i64} {
  func.func @_p_kernel(%arg0: i32, %arg1: memref<16x768xf32, #tpu.memory_space<vmem>>, %arg2: memref<768x128xbf16, #tpu.memory_space<vmem>>, %arg3: memref<1x128xf32, #tpu.memory_space<vmem>>, %arg4: memref<128x2xf32, #tpu.memory_space<vmem>>, %arg5: memref<1x2xf32, #tpu.memory_space<vmem>>, %arg6: memref<16x2xf32, #tpu.memory_space<vmem>>) attributes {dimension_semantics = [#tpu.dimension_semantics<parallel>], iteration_bounds = array<i64: 1>, scalar_prefetch = 0 : i64, scratch_operands = 0 : i64, tpu.core_type = #tpu.core_type<tc>, window_params = [{transform_indices = @transform_0, window_bounds = array<i64: 16, 768>}, {pipeline_mode = #tpu.pipeline_mode<synchronous>, transform_indices = @transform_1, window_bounds = array<i64: 768, 128>}, {pipeline_mode = #tpu.pipeline_mode<synchronous>, transform_indices = @transform_2, window_bounds = array<i64: 1, 128>}, {pipeline_mode = #tpu.pipeline_mode<synchronous>, transform_indices = @transform_3, window_bounds = array<i64: 128, 2>}, {pipeline_mode = #tpu.pipeline_mode<synchronous>, transform_indices = @transform_4, window_bounds = array<i64: 1, 2>}, {transform_indices = @transform_5, window_bounds = array<i64: 16, 2>}]} {
    %c0 = arith.constant 0 : index
    %c0_0 = arith.constant 0 : index
    %0 = vector.load %arg1[%c0, %c0_0] : memref<16x768xf32, #tpu.memory_space<vmem>>, vector<16x768xf32>
    %1 = arith.truncf %0 : vector<16x768xf32> to vector<16x768xbf16>
    %c0_1 = arith.constant 0 : index
    %c0_2 = arith.constant 0 : index
    %2 = vector.load %arg2[%c0_1, %c0_2] : memref<768x128xbf16, #tpu.memory_space<vmem>>, vector<768x128xbf16>
    %cst = arith.constant dense<0.000000e+00> : vector<16x128xf32>
    %3 = tpu.matmul %1, %2, %cst {dimension_numbers = #tpu.dot_dimension_numbers<[1], [0], [0], [1], [0, 0, 1, 1], [], []>} : vector<16x768xbf16>, vector<768x128xbf16>, vector<16x128xf32> -> vector<16x128xf32>
    %c0_3 = arith.constant 0 : index
    %c0_4 = arith.constant 0 : index
    %4 = vector.load %arg3[%c0_3, %c0_4] : memref<1x128xf32, #tpu.memory_space<vmem>>, vector<1x128xf32>
    %5 = vector.broadcast %4 : vector<1x128xf32> to vector<16x128xf32>
    %6 = arith.addf %3, %5 : vector<16x128xf32>
    %7 = math.tanh %6 : vector<16x128xf32>
    %c0_5 = arith.constant 0 : index
    %c0_6 = arith.constant 0 : index
    %8 = vector.load %arg4[%c0_5, %c0_6] : memref<128x2xf32, #tpu.memory_space<vmem>>, vector<128x2xf32>
    %cst_7 = arith.constant dense<0.000000e+00> : vector<16x2xf32>
    %9 = tpu.matmul %7, %8, %cst_7 {dimension_numbers = #tpu.dot_dimension_numbers<[1], [0], [0], [1], [0, 0, 1, 1], [], []>} : vector<16x128xf32>, vector<128x2xf32>, vector<16x2xf32> -> vector<16x2xf32>
    %c0_8 = arith.constant 0 : index
    %c0_9 = arith.constant 0 : index
    %10 = vector.load %arg5[%c0_8, %c0_9] : memref<1x2xf32, #tpu.memory_space<vmem>>, vector<1x2xf32>
    %11 = vector.broadcast %10 : vector<1x2xf32> to vector<16x2xf32>
    %12 = arith.addf %9, %11 : vector<16x2xf32>
    %c0_10 = arith.constant 0 : index
    %c0_11 = arith.constant 0 : index
    %13 = vector.load %arg6[%c0_10, %c0_11] : memref<16x2xf32, #tpu.memory_space<vmem>>, vector<16x2xf32>
    tpu.vector_store %arg6[%c0_10, %c0_11], %12 {strides = array<i32>} : memref<16x2xf32, #tpu.memory_space<vmem>>, vector<16x2xf32>,
    return
  }
  func.func @transform_0(%arg0: i32) -> (i32, i32) {
    %c0_i32 = arith.constant 0 : i32
    %c0_i32_0 = arith.constant 0 : i32
    return %arg0, %c0_i32 : i32, i32
  }
  func.func @transform_1(%arg0: i32) -> (i32, i32) {
    %c0_i32 = arith.constant 0 : i32
    %c0_i32_0 = arith.constant 0 : i32
    %c0_i32_1 = arith.constant 0 : i32
    return %c0_i32, %c0_i32_0 : i32, i32
  }
  func.func @transform_2(%arg0: i32) -> (i32, i32) {
    %c0_i32 = arith.constant 0 : i32
    %c0_i32_0 = arith.constant 0 : i32
    %c0_i32_1 = arith.constant 0 : i32
    return %c0_i32, %c0_i32_0 : i32, i32
  }
  func.func @transform_3(%arg0: i32) -> (i32, i32) {
    %c0_i32 = arith.constant 0 : i32
    %c0_i32_0 = arith.constant 0 : i32
    %c0_i32_1 = arith.constant 0 : i32
    return %c0_i32, %c0_i32_0 : i32, i32
  }
  func.func @transform_4(%arg0: i32) -> (i32, i32) {
    %c0_i32 = arith.constant 0 : i32
    %c0_i32_0 = arith.constant 0 : i32
    %c0_i32_1 = arith.constant 0 : i32
    return %c0_i32, %c0_i32_0 : i32, i32
  }
  func.func @transform_5(%arg0: i32) -> (i32, i32) {
    %c0_i32 = arith.constant 0 : i32
    %c0_i32_0 = arith.constant 0 : i32
    return %arg0, %c0_i32 : i32, i32
  }
}

</mosaic_0001>

<llo_original>
// kernel: tpu_custom_call.1
$region0: #{tpu_custom_call.1}
  #allocation0 [shape = 'u32[]', space=smem, size = 0x4, offset = 0x4, fixed_abs, tag = 'smem constant byte address 0x4 - core index']
  #allocation1 [shape = 'u32[72,128]{1,0:T(1,128)}', space=vmem, size = 0x9000, scoped, tag = 'internal scratch']
  %s0 = inlined_call_operand.vmem [shape: f32[16,768], index: 0, kind: input, shape index: {}]
  %s1 = inlined_call_operand.hbm [shape: bf16[768,128], index: 1, kind: input, shape index: {}]
  %s2 = inlined_call_operand.vmem [shape: f32[1,128], index: 2, kind: input, shape index: {}]
  %s3 = inlined_call_operand.vmem [shape: f32[128,2], index: 3, kind: input, shape index: {}]
  %s4 = inlined_call_operand.vmem [shape: f32[1,2], index: 4, kind: input, shape index: {}]
  %s5 = inlined_call_operand.vmem [shape: f32[16,2], index: 5, kind: output, shape index: {}]
  %s6 = sld [smem:[#allocation0]]
  $region34: #{tpu_custom_call.1} parent=0
    _
  %s8 = ssub.s32 1, %s6
  %s9 = scalar_select 0, %s8, %s6
  $region1: #{tpu_custom_call.1} parent=0
    #allocation2 [shape = 'u8[196608]{0}', space=vmem, size = 0x30000, scoped, tag = 'input window, operand 1, single buffered']
    #allocation3 [shape = 's32[1]{0}', space=sflag, size = 0x4, scoped, tag = 'scoped memory for tpu_custom_call.1']
    %10 = vsyncpa [#allocation3], 0
    // Predicated region
    $region2: #{tpu_custom_call.1} parent=1 // pred_check
      _
    $region3: #{tpu_custom_call.1} parent=1 // pred_check_branch
      %12 = sbr.rel (0) target = $region5
    $region4: #{tpu_custom_call.1} parent=1 // pred_region
      _
    $region5: #{tpu_custom_call.1} parent=1 // pred_fallthru
      _
    // Predicated region
    $region6: #{tpu_custom_call.1} parent=1 // pred_check
      _
    $region7: #{tpu_custom_call.1} parent=1 // pred_check_branch
      %14 = sbr.rel (0) target = $region9
    $region8: #{tpu_custom_call.1} parent=1 // pred_region
      %16 = vsyncadd [#allocation3], 0
      %s17 = sshll.u32 %s1, 4
      %s18 = int_to_ptr.hbm [resolvable:$true] %s17
      %s19 = sshll.u32 [#allocation2], 4
      %s20 = int_to_ptr.vmem [resolvable:$true] %s19
      %25 = dma.hbm_to_vmem [thread:$0]  %s18, 6144, %s20, [#allocation3], 64, 64, 4
    $region9: #{tpu_custom_call.1} parent=1 // pred_fallthru
      _
    // Predicated region
    $region10: #{tpu_custom_call.1} parent=1 // pred_check
      _
    $region11: #{tpu_custom_call.1} parent=1 // pred_check_branch
      %27 = sbr.rel (0) target = $region13
    $region12: #{tpu_custom_call.1} parent=1 // pred_region
      _
    $region13: #{tpu_custom_call.1} parent=1 // pred_fallthru
      _
    // Predicated region
    $region14: #{tpu_custom_call.1} parent=1 // pred_check
      _
    $region15: #{tpu_custom_call.1} parent=1 // pred_check_branch
      %29 = sbr.rel (0) target = $region17
    $region16: #{tpu_custom_call.1} parent=1 // pred_region
      _
    $region17: #{tpu_custom_call.1} parent=1 // pred_fallthru
      _
    // Predicated region
    $region18: #{tpu_custom_call.1} parent=1 // pred_check
      _
    $region19: #{tpu_custom_call.1} parent=1 // pred_check_branch
      %31 = sbr.rel (0) target = $region21
    $region20: #{tpu_custom_call.1} parent=1 // pred_region
      _
    $region21: #{tpu_custom_call.1} parent=1 // pred_fallthru
      _
    // Predicated region
    $region22: #{tpu_custom_call.1} parent=1 // pred_check
      _
    $region23: #{tpu_custom_call.1} parent=1 // pred_check_branch
      %33 = sbr.rel (0) target = $region25
    $region24: #{tpu_custom_call.1} parent=1 // pred_region
      %35 = dma.done [#allocation3], 6144
    $region25: #{tpu_custom_call.1} parent=1 // pred_fallthru
      _
    %v36 = vld [vmem:[%s0] sm:$0xff]
    %v37 = vld [vmem:[%s0 + $0x8] sm:$0xff]
    %v38 = vld [vmem:[%s0 + $0x10] sm:$0xff]
    %v39 = vld [vmem:[%s0 + $0x18] sm:$0xff]
    %v40 = vld [vmem:[%s0 + $0x20] sm:$0xff]
    %v41 = vld [vmem:[%s0 + $0x28] sm:$0xff]
    %v42 = vld [vmem:[%s0 + $0x30] sm:$0xff]
    %v43 = vld [vmem:[%s0 + $0x38] sm:$0xff]
    %v44 = vld [vmem:[%s0 + $0x40] sm:$0xff]
    %v45 = vld [vmem:[%s0 + $0x48] sm:$0xff]
    %v46 = vld [vmem:[%s0 + $0x50] sm:$0xff]
    %v47 = vld [vmem:[%s0 + $0x58] sm:$0xff]
    %v48 = vpack.c.bf16 %v42, %v36
    %v49 = vpack.c.bf16 %v43, %v37
    %v50 = vpack.c.bf16 %v44, %v38
    %v51 = vpack.c.bf16 %v45, %v39
    %v52 = vpack.c.bf16 %v46, %v40
    %v53 = vpack.c.bf16 %v47, %v41
    %v54 = vld [vmem:[#allocation2] sm:$0xf]
    %v55 = vld [vmem:[#allocation2 + $0x4] sm:$0xf]
    %v56 = vld [vmem:[#allocation2 + $0x8] sm:$0xf]
    %v57 = vld [vmem:[#allocation2 + $0xc] sm:$0xf]
    %v58 = vld [vmem:[#allocation2 + $0x10] sm:$0xf]
    %v59 = vld [vmem:[#allocation2 + $0x14] sm:$0xf]
    %v60 = vld [vmem:[#allocation2 + $0x18] sm:$0xf]
    %v61 = vld [vmem:[#allocation2 + $0x1c] sm:$0xf]
    %v62 = vld [vmem:[#allocation2 + $0x20] sm:$0xf]
    %v63 = vld [vmem:[#allocation2 + $0x24] sm:$0xf]
    %v64 = vld [vmem:[#allocation2 + $0x28] sm:$0xf]
    %v65 = vld [vmem:[#allocation2 + $0x2c] sm:$0xf]
    %v66 = vld [vmem:[#allocation2 + $0x30] sm:$0xf]
    %v67 = vld [vmem:[#allocation2 + $0x34] sm:$0xf]
    %v68 = vld [vmem:[#allocation2 + $0x38] sm:$0xf]
    %v69 = vld [vmem:[#allocation2 + $0x3c] sm:$0xf]
    %v70 = vld [vmem:[#allocation2 + $0x40] sm:$0xf]
    %v71 = vld [vmem:[#allocation2 + $0x44] sm:$0xf]
    %v72 = vld [vmem:[#allocation2 + $0x48] sm:$0xf]
    %v73 = vld [vmem:[#allocation2 + $0x4c] sm:$0xf]
    %v74 = vld [vmem:[#allocation2 + $0x50] sm:$0xf]
    %v75 = vld [vmem:[#allocation2 + $0x54] sm:$0xf]
    %v76 = vld [vmem:[#allocation2 + $0x58] sm:$0xf]
    %v77 = vld [vmem:[#allocation2 + $0x5c] sm:$0xf]
    %v78 = vld [vmem:[#allocation2 + $0x60] sm:$0xf]
    %v79 = vld [vmem:[#allocation2 + $0x64] sm:$0xf]
    %v80 = vld [vmem:[#allocation2 + $0x68] sm:$0xf]
    %v81 = vld [vmem:[#allocation2 + $0x6c] sm:$0xf]
    %v82 = vld [vmem:[#allocation2 + $0x70] sm:$0xf]
    %v83 = vld [vmem:[#allocation2 + $0x74] sm:$0xf]
    %v84 = vld [vmem:[#allocation2 + $0x78] sm:$0xf]
    %v85 = vld [vmem:[#allocation2 + $0x7c] sm:$0xf]
    %v86 = vld [vmem:[#allocation2 + $0x80] sm:$0xf]
    %v87 = vld [vmem:[#allocation2 + $0x84] sm:$0xf]
    %v88 = vld [vmem:[#allocation2 + $0x88] sm:$0xf]
    %v89 = vld [vmem:[#allocation2 + $0x8c] sm:$0xf]
    %v90 = vld [vmem:[#allocation2 + $0x90] sm:$0xf]
    %v91 = vld [vmem:[#allocation2 + $0x94] sm:$0xf]
    %v92 = vld [vmem:[#allocation2 + $0x98] sm:$0xf]
    %v93 = vld [vmem:[#allocation2 + $0x9c] sm:$0xf]
    %v94 = vld [vmem:[#allocation2 + $0xa0] sm:$0xf]
    %v95 = vld [vmem:[#allocation2 + $0xa4] sm:$0xf]
    %v96 = vld [vmem:[#allocation2 + $0xa8] sm:$0xf]
    %v97 = vld [vmem:[#allocation2 + $0xac] sm:$0xf]
    %v98 = vld [vmem:[#allocation2 + $0xb0] sm:$0xf]
    %v99 = vld [vmem:[#allocation2 + $0xb4] sm:$0xf]
    %v100 = vld [vmem:[#allocation2 + $0xb8] sm:$0xf]
    %v101 = vld [vmem:[#allocation2 + $0xbc] sm:$0xf]
    %v102 = vld [vmem:[#allocation2 + $0xc0] sm:$0xf]
    %v103 = vld [vmem:[#allocation2 + $0xc4] sm:$0xf]
    %v104 = vld [vmem:[#allocation2 + $0xc8] sm:$0xf]
    %v105 = vld [vmem:[#allocation2 + $0xcc] sm:$0xf]
    %v106 = vld [vmem:[#allocation2 + $0xd0] sm:$0xf]
    %v107 = vld [vmem:[#allocation2 + $0xd4] sm:$0xf]
    %v108 = vld [vmem:[#allocation2 + $0xd8] sm:$0xf]
    %v109 = vld [vmem:[#allocation2 + $0xdc] sm:$0xf]
    %v110 = vld [vmem:[#allocation2 + $0xe0] sm:$0xf]
    %v111 = vld [vmem:[#allocation2 + $0xe4] sm:$0xf]
    %v112 = vld [vmem:[#allocation2 + $0xe8] sm:$0xf]
    %v113 = vld [vmem:[#allocation2 + $0xec] sm:$0xf]
    %v114 = vld [vmem:[#allocation2 + $0xf0] sm:$0xf]
    %v115 = vld [vmem:[#allocation2 + $0xf4] sm:$0xf]
    %v116 = vld [vmem:[#allocation2 + $0xf8] sm:$0xf]
    %v117 = vld [vmem:[#allocation2 + $0xfc] sm:$0xf]
    %v118 = vld [vmem:[#allocation2 + $0x100] sm:$0xf]
    %v119 = vld [vmem:[#allocation2 + $0x104] sm:$0xf]
    %v120 = vld [vmem:[#allocation2 + $0x108] sm:$0xf]
    %v121 = vld [vmem:[#allocation2 + $0x10c] sm:$0xf]
    %v122 = vld [vmem:[#allocation2 + $0x110] sm:$0xf]
    %v123 = vld [vmem:[#allocation2 + $0x114] sm:$0xf]
    %v124 = vld [vmem:[#allocation2 + $0x118] sm:$0xf]
    %v125 = vld [vmem:[#allocation2 + $0x11c] sm:$0xf]
    %v126 = vld [vmem:[#allocation2 + $0x120] sm:$0xf]
    %v127 = vld [vmem:[#allocation2 + $0x124] sm:$0xf]
    %v128 = vld [vmem:[#allocation2 + $0x128] sm:$0xf]
    %v129 = vld [vmem:[#allocation2 + $0x12c] sm:$0xf]
    %v130 = vld [vmem:[#allocation2 + $0x130] sm:$0xf]
    %v131 = vld [vmem:[#allocation2 + $0x134] sm:$0xf]
    %v132 = vld [vmem:[#allocation2 + $0x138] sm:$0xf]
    %v133 = vld [vmem:[#allocation2 + $0x13c] sm:$0xf]
    %v134 = vld [vmem:[#allocation2 + $0x140] sm:$0xf]
    %v135 = vld [vmem:[#allocation2 + $0x144] sm:$0xf]
    %v136 = vld [vmem:[#allocation2 + $0x148] sm:$0xf]
    %v137 = vld [vmem:[#allocation2 + $0x14c] sm:$0xf]
    %v138 = vld [vmem:[#allocation2 + $0x150] sm:$0xf]
    %v139 = vld [vmem:[#allocation2 + $0x154] sm:$0xf]
    %v140 = vld [vmem:[#allocation2 + $0x158] sm:$0xf]
    %v141 = vld [vmem:[#allocation2 + $0x15c] sm:$0xf]
    %v142 = vld [vmem:[#allocation2 + $0x160] sm:$0xf]
    %v143 = vld [vmem:[#allocation2 + $0x164] sm:$0xf]
    %v144 = vld [vmem:[#allocation2 + $0x168] sm:$0xf]
    %v145 = vld [vmem:[#allocation2 + $0x16c] sm:$0xf]
    %v146 = vld [vmem:[#allocation2 + $0x170] sm:$0xf]
    %v147 = vld [vmem:[#allocation2 + $0x174] sm:$0xf]
    %v148 = vld [vmem:[#allocation2 + $0x178] sm:$0xf]
    %v149 = vld [vmem:[#allocation2 + $0x17c] sm:$0xf]
    %v150 = vld [vmem:[%s2] sm:$0x1]
    %v152 = vperm.slane %v150, 0
    %v250 = vunpack.c.l.b16 %v54
    %v251 = vunpack.c.l.b16 %v55
    %v252 = vunpack.c.l.b16 %v56
    %v253 = vunpack.c.l.b16 %v57
    %v254 = vunpack.c.l.b16 %v58
    %v255 = vunpack.c.l.b16 %v59
    %v256 = vunpack.c.l.b16 %v60
    %v257 = vunpack.c.l.b16 %v61
    %v258 = vunpack.c.l.b16 %v62
    %v259 = vunpack.c.l.b16 %v63
    %v260 = vunpack.c.l.b16 %v64
    %v261 = vunpack.c.l.b16 %v65
    %v262 = vunpack.c.l.b16 %v66
    %v263 = vunpack.c.l.b16 %v67
    %v264 = vunpack.c.l.b16 %v68
    %v265 = vunpack.c.l.b16 %v69
    %v266 = vunpack.c.l.b16 %v70
    %v267 = vunpack.c.l.b16 %v71
    %v268 = vunpack.c.l.b16 %v72
    %v269 = vunpack.c.l.b16 %v73
    %v270 = vunpack.c.l.b16 %v74
    %v271 = vunpack.c.l.b16 %v75
    %v272 = vunpack.c.l.b16 %v76
    %v273 = vunpack.c.l.b16 %v77
    %v274 = vunpack.c.l.b16 %v78
    %v275 = vunpack.c.l.b16 %v79
    %v276 = vunpack.c.l.b16 %v80
    %v277 = vunpack.c.l.b16 %v81
    %v278 = vunpack.c.l.b16 %v82
    %v279 = vunpack.c.l.b16 %v83
    %v280 = vunpack.c.l.b16 %v84
    %v281 = vunpack.c.l.b16 %v85
    %v282 = vunpack.c.l.b16 %v86
    %v283 = vunpack.c.l.b16 %v87
    %v284 = vunpack.c.l.b16 %v88
    %v285 = vunpack.c.l.b16 %v89
    %v286 = vunpack.c.l.b16 %v90
    %v287 = vunpack.c.l.b16 %v91
    %v288 = vunpack.c.l.b16 %v92
    %v289 = vunpack.c.l.b16 %v93
    %v290 = vunpack.c.l.b16 %v94
    %v291 = vunpack.c.l.b16 %v95
    %v292 = vunpack.c.l.b16 %v96
    %v293 = vunpack.c.l.b16 %v97
    %v294 = vunpack.c.l.b16 %v98
    %v295 = vunpack.c.l.b16 %v99
    %v296 = vunpack.c.l.b16 %v100
    %v297 = vunpack.c.l.b16 %v101
    %v298 = vunpack.c.l.b16 %v102
    %v299 = vunpack.c.l.b16 %v103
    %v300 = vunpack.c.l.b16 %v104
    %v301 = vunpack.c.l.b16 %v105
    %v302 = vunpack.c.l.b16 %v106
    %v303 = vunpack.c.l.b16 %v107
    %v304 = vunpack.c.l.b16 %v108
    %v305 = vunpack.c.l.b16 %v109
    %v306 = vunpack.c.l.b16 %v110
    %v307 = vunpack.c.l.b16 %v111
    %v308 = vunpack.c.l.b16 %v112
    %v309 = vunpack.c.l.b16 %v113
    %v310 = vunpack.c.l.b16 %v114
    %v311 = vunpack.c.l.b16 %v115
    %v312 = vunpack.c.l.b16 %v116
    %v313 = vunpack.c.l.b16 %v117
    %v314 = vunpack.c.l.b16 %v118
    %v315 = vunpack.c.l.b16 %v119
    %v316 = vunpack.c.l.b16 %v120
    %v317 = vunpack.c.l.b16 %v121
    %v318 = vunpack.c.l.b16 %v122
    %v319 = vunpack.c.l.b16 %v123
    %v320 = vunpack.c.l.b16 %v124
    %v321 = vunpack.c.l.b16 %v125
    %v322 = vunpack.c.l.b16 %v126
    %v323 = vunpack.c.l.b16 %v127
    %v324 = vunpack.c.l.b16 %v128
    %v325 = vunpack.c.l.b16 %v129
    %v326 = vunpack.c.l.b16 %v130
    %v327 = vunpack.c.l.b16 %v131
    %v328 = vunpack.c.l.b16 %v132
    %v329 = vunpack.c.l.b16 %v133
    %v330 = vunpack.c.l.b16 %v134
    %v331 = vunpack.c.l.b16 %v135
    %v332 = vunpack.c.l.b16 %v136
    %v333 = vunpack.c.l.b16 %v137
    %v334 = vunpack.c.l.b16 %v138
    %v335 = vunpack.c.l.b16 %v139
    %v336 = vunpack.c.l.b16 %v140
    %v337 = vunpack.c.l.b16 %v141
    %v338 = vunpack.c.l.b16 %v142
    %v339 = vunpack.c.l.b16 %v143
    %v340 = vunpack.c.l.b16 %v144
    %v341 = vunpack.c.l.b16 %v145
    %v342 = vunpack.c.l.b16 %v146
    %v343 = vunpack.c.l.b16 %v147
    %v344 = vunpack.c.l.b16 %v148
    %v345 = vunpack.c.l.b16 %v149
    %v346 = vpack.c.b16 %v251, %v250
    %v347 = vpack.c.b16 %v253, %v252
    %v348 = vpack.c.b16 %v255, %v254
    %v349 = vpack.c.b16 %v257, %v256
    %v350 = vpack.c.b16 %v259, %v258
    %v351 = vpack.c.b16 %v261, %v260
    %v352 = vpack.c.b16 %v263, %v262
    %v353 = vpack.c.b16 %v265, %v264
    %v354 = vpack.c.b16 %v267, %v266
    %v355 = vpack.c.b16 %v269, %v268
    %v356 = vpack.c.b16 %v271, %v270
    %v357 = vpack.c.b16 %v273, %v272
    %v358 = vpack.c.b16 %v275, %v274
    %v359 = vpack.c.b16 %v277, %v276
    %v360 = vpack.c.b16 %v279, %v278
    %v361 = vpack.c.b16 %v281, %v280
    %v362 = vpack.c.b16 %v283, %v282
    %v363 = vpack.c.b16 %v285, %v284
    %v364 = vpack.c.b16 %v287, %v286
    %v365 = vpack.c.b16 %v289, %v288
    %v366 = vpack.c.b16 %v291, %v290
    %v367 = vpack.c.b16 %v293, %v292
    %v368 = vpack.c.b16 %v295, %v294
    %v369 = vpack.c.b16 %v297, %v296
    %v370 = vpack.c.b16 %v299, %v298
    %v371 = vpack.c.b16 %v301, %v300
    %v372 = vpack.c.b16 %v303, %v302
    %v373 = vpack.c.b16 %v305, %v304
    %v374 = vpack.c.b16 %v307, %v306
    %v375 = vpack.c.b16 %v309, %v308
    %v376 = vpack.c.b16 %v311, %v310
    %v377 = vpack.c.b16 %v313, %v312
    %v378 = vpack.c.b16 %v315, %v314
    %v379 = vpack.c.b16 %v317, %v316
    %v380 = vpack.c.b16 %v319, %v318
    %v381 = vpack.c.b16 %v321, %v320
    %v382 = vpack.c.b16 %v323, %v322
    %v383 = vpack.c.b16 %v325, %v324
    %v384 = vpack.c.b16 %v327, %v326
    %v385 = vpack.c.b16 %v329, %v328
    %v386 = vpack.c.b16 %v331, %v330
    %v387 = vpack.c.b16 %v333, %v332
    %v388 = vpack.c.b16 %v335, %v334
    %v389 = vpack.c.b16 %v337, %v336
    %v390 = vpack.c.b16 %v339, %v338
    %v391 = vpack.c.b16 %v341, %v340
    %v392 = vpack.c.b16 %v343, %v342
    %v393 = vpack.c.b16 %v345, %v344
    %442 = vmatpush.bf16.msra.mxu0 %v353
    %443 = vmatpush.bf16.msra.mxu0 %v352
    %444 = vmatpush.bf16.msra.mxu0 %v351
    %445 = vmatpush.bf16.msra.mxu0 %v350
    %446 = vmatpush.bf16.msra.mxu0 %v349
    %447 = vmatpush.bf16.msra.mxu0 %v348
    %448 = vmatpush.bf16.msra.mxu0 %v347
    %449 = vmatpush.bf16.msra.mxu0 %v346
    %450 = vmatmul.bf16.gmra.mxu0 %v48
    %v451 = vpop.f32.mrf.mxu0
    %v452 = vadd.f32 %v152, %v451
    %v453 = vpop.f32.mrf.mxu0
    %v454 = vadd.f32 %v152, %v453
    %455 = vdwg.mxu0
    %456 = vmatpush.bf16.msra.mxu0 %v361
    %457 = vmatpush.bf16.msra.mxu0 %v360
    %458 = vmatpush.bf16.msra.mxu0 %v359
    %459 = vmatpush.bf16.msra.mxu0 %v358
    %460 = vmatpush.bf16.msra.mxu0 %v357
    %461 = vmatpush.bf16.msra.mxu0 %v356
    %462 = vmatpush.bf16.msra.mxu0 %v355
    %463 = vmatpush.bf16.msra.mxu0 %v354
    %464 = vmatmul.bf16.gmra.mxu0 %v49
    %v465 = vpop.f32.mrf.mxu0
    %v466 = vadd.f32 %v452, %v465
    %v467 = vpop.f32.mrf.mxu0
    %v468 = vadd.f32 %v454, %v467
    %469 = vdwg.mxu0
    %470 = vmatpush.bf16.msra.mxu0 %v369
    %471 = vmatpush.bf16.msra.mxu0 %v368
    %472 = vmatpush.bf16.msra.mxu0 %v367
    %473 = vmatpush.bf16.msra.mxu0 %v366
    %474 = vmatpush.bf16.msra.mxu0 %v365
    %475 = vmatpush.bf16.msra.mxu0 %v364
    %476 = vmatpush.bf16.msra.mxu0 %v363
    %477 = vmatpush.bf16.msra.mxu0 %v362
    %478 = vmatmul.bf16.gmra.mxu0 %v50
    %v479 = vpop.f32.mrf.mxu0
    %v480 = vadd.f32 %v466, %v479
    %v481 = vpop.f32.mrf.mxu0
    %v482 = vadd.f32 %v468, %v481
    %483 = vdwg.mxu0
    %484 = vmatpush.bf16.msra.mxu0 %v377
    %485 = vmatpush.bf16.msra.mxu0 %v376
    %486 = vmatpush.bf16.msra.mxu0 %v375
    %487 = vmatpush.bf16.msra.mxu0 %v374
    %488 = vmatpush.bf16.msra.mxu0 %v373
    %489 = vmatpush.bf16.msra.mxu0 %v372
    %490 = vmatpush.bf16.msra.mxu0 %v371
    %491 = vmatpush.bf16.msra.mxu0 %v370
    %492 = vmatmul.bf16.gmra.mxu0 %v51
    %v493 = vpop.f32.mrf.mxu0
    %v494 = vadd.f32 %v480, %v493
    %v495 = vpop.f32.mrf.mxu0
    %v496 = vadd.f32 %v482, %v495
    %497 = vdwg.mxu0
    %498 = vmatpush.bf16.msra.mxu0 %v385
    %499 = vmatpush.bf16.msra.mxu0 %v384
    %500 = vmatpush.bf16.msra.mxu0 %v383
    %501 = vmatpush.bf16.msra.mxu0 %v382
    %502 = vmatpush.bf16.msra.mxu0 %v381
    %503 = vmatpush.bf16.msra.mxu0 %v380
    %504 = vmatpush.bf16.msra.mxu0 %v379
    %505 = vmatpush.bf16.msra.mxu0 %v378
    %506 = vmatmul.bf16.gmra.mxu0 %v52
    %v507 = vpop.f32.mrf.mxu0
    %v508 = vadd.f32 %v494, %v507
    %v509 = vpop.f32.mrf.mxu0
    %v510 = vadd.f32 %v496, %v509
    %511 = vdwg.mxu0
    %512 = vmatpush.bf16.msra.mxu0 %v393
    %513 = vmatpush.bf16.msra.mxu0 %v392
    %514 = vmatpush.bf16.msra.mxu0 %v391
    %515 = vmatpush.bf16.msra.mxu0 %v390
    %516 = vmatpush.bf16.msra.mxu0 %v389
    %517 = vmatpush.bf16.msra.mxu0 %v388
    %518 = vmatpush.bf16.msra.mxu0 %v387
    %519 = vmatpush.bf16.msra.mxu0 %v386
    %520 = vmatmul.bf16.gmra.mxu0 %v53
    %v521 = vpop.f32.mrf.mxu0
    %v522 = vadd.f32 %v508, %v521
    %v523 = vpop.f32.mrf.mxu0
    %v524 = vadd.f32 %v510, %v523
    %525 = vdwg.mxu0
    %v526 = vtanh.pop %v522
    %v527 = vtanh.pop %v524
    %v528 = vld [vmem:[%s3] sm:$0xff]
    %v529 = vld [vmem:[%s3 + $0x8] sm:$0xff]
    %v530 = vld [vmem:[%s3 + $0x10] sm:$0xff]
    %v531 = vld [vmem:[%s3 + $0x18] sm:$0xff]
    %v532 = vld [vmem:[%s3 + $0x20] sm:$0xff]
    %v533 = vld [vmem:[%s3 + $0x28] sm:$0xff]
    %v534 = vld [vmem:[%s3 + $0x30] sm:$0xff]
    %v535 = vld [vmem:[%s3 + $0x38] sm:$0xff]
    %v536 = vld [vmem:[%s3 + $0x40] sm:$0xff]
    %v537 = vld [vmem:[%s3 + $0x48] sm:$0xff]
    %v538 = vld [vmem:[%s3 + $0x50] sm:$0xff]
    %v539 = vld [vmem:[%s3 + $0x58] sm:$0xff]
    %v540 = vld [vmem:[%s3 + $0x60] sm:$0xff]
    %v541 = vld [vmem:[%s3 + $0x68] sm:$0xff]
    %v542 = vld [vmem:[%s3 + $0x70] sm:$0xff]
    %v543 = vld [vmem:[%s3 + $0x78] sm:$0xff]
    %v544 = vld [vmem:[%s4] sm:$0x1]
    %v546 = vperm.slane %v544, 0
    %548 = vmatpush.msra.mxu0 %v543
    %549 = vmatpush.msra.mxu0 %v542
    %550 = vmatpush.msra.mxu0 %v541
    %551 = vmatpush.msra.mxu0 %v540
    %552 = vmatpush.msra.mxu0 %v539
    %553 = vmatpush.msra.mxu0 %v538
    %554 = vmatpush.msra.mxu0 %v537
    %555 = vmatpush.msra.mxu0 %v536
    %556 = vmatpush.msra.mxu0 %v535
    %557 = vmatpush.msra.mxu0 %v534
    %558 = vmatpush.msra.mxu0 %v533
    %559 = vmatpush.msra.mxu0 %v532
    %560 = vmatpush.msra.mxu0 %v531
    %561 = vmatpush.msra.mxu0 %v530
    %562 = vmatpush.msra.mxu0 %v529
    %563 = vmatpush.msra.mxu0 %v528
    %564 = vmatmul.f32.gmra.mxu0 %v526
    %v565 = vpop.f32.mrf.mxu0
    %v566 = vadd.f32 %v546, %v565
    %567 = vmatmul.f32.gmra.mxu0 %v527
    %v568 = vpop.f32.mrf.mxu0
    %v569 = vadd.f32 %v546, %v568
    %570 = vdwg.mxu0
    %vm571 = vcmask 15360
    %572 = vst.msk [vmem:[%s5] sm:$0xff] %vm571, %v566
    %573 = vst.msk [vmem:[%s5 + $0x8] sm:$0xff] %vm571, %v569
    // Predicated region
    $region26: #{tpu_custom_call.1} parent=1 // pred_check
      _
    $region27: #{tpu_custom_call.1} parent=1 // pred_check_branch
      %575 = sbr.rel (0) target = $region29
    $region28: #{tpu_custom_call.1} parent=1 // pred_region
      _
    $region29: #{tpu_custom_call.1} parent=1 // pred_fallthru
      _
    // Predicated region
    $region30: #{tpu_custom_call.1} parent=1 // pred_check
      _
    $region31: #{tpu_custom_call.1} parent=1 // pred_check_branch
      %577 = sbr.rel (0) target = $region33
    $region32: #{tpu_custom_call.1} parent=1 // pred_region
      _
    $region33: #{tpu_custom_call.1} parent=1 // pred_fallthru
      _
    %578 = vsyncpa [#allocation3], 1

</llo_original>
